<compile_context>
chip_gen: v7x
topology: tpu7x:2x2x1
jax: 0.10.0
libtpu: 0.0.40
codegen_flags: <defaults>
</compile_context>

<pallas_src>
import functools

import jax
import jax.numpy as jnp
import numpy as np
from jax.experimental import pallas as pl
from jax.experimental.pallas import tpu as pltpu


def attention_kernel(dec_ref, enc_ref,
                     w1d_ref, w1e_ref, b1_ref, v_ref,
                     w2d_ref, w2e_ref, b2_ref,
                     out_ref, *, seq_len, fast_math, tanh_dtype):
    TB, S_pad, E = enc_ref.shape
    H = dec_ref.shape[-1]

    dec = dec_ref[...]            # [TB, H]        (f32, or bf16 in fast mode)
    enc = enc_ref[...]            # [TB, S_pad, E]

    # ---- attention MLP: tanh([dec_rep, enc] @ W1^T + b1), concat-free -------
    # Batch folded into the MXU M-dimension: one [TB*S_pad, E] @ [E, H] matmul.
    # S_pad is sublane-aligned by the wrapper, so both reshapes are relabels.
    h_enc = jnp.dot(enc.reshape(TB * S_pad, E), w1e_ref[...],
                    preferred_element_type=jnp.float32).reshape(TB, S_pad, H)
    h_dec = jnp.dot(dec, w1d_ref[...],
                    preferred_element_type=jnp.float32) + b1_ref[...]       # [TB, H]
    # tanh on the EUP; bf16 in fast mode (v6e/v7x bf16 EUP ~2x), f32 otherwise.
    hidden = jnp.tanh((h_enc + h_dec[:, None, :]).astype(tanh_dtype))       # [TB, S_pad, H]

    # ---- scores, lane-dense [TB, S_pad]; v stored as a [1, H] row ------------
    v_row = v_ref[...].astype(jnp.float32)                                  # [1, H]
    scores = jnp.sum(hidden.astype(jnp.float32) * v_row[None, :, :], axis=-1)

    # Mask host-side sequence padding (present only if S was not sublane-aligned).
    if S_pad != seq_len:
        pos = jax.lax.broadcasted_iota(jnp.int32, scores.shape, 1)
        scores = jnp.where(pos < seq_len, scores, jnp.float32(-1e30))

    # ---- softmax over the sequence axis (f32) --------------------------------
    m = jnp.max(scores, axis=-1, keepdims=True)
    e = jnp.exp(scores - m)
    denom = jnp.sum(e, axis=-1, keepdims=True)
    if fast_math:
        weights = e * pl.reciprocal(denom, approx=True)   # EUP slot, ~free
    else:
        weights = e / denom

    # ---- context: exact f32 VPU multiply + sublane reduce --------------------
    # Kept off the MXU even in fast mode: the M=1 batched contraction wastes
    # MXU sublanes, its FLOPs are ~1/H of the main matmul, and keeping the
    # softmax weights in f32 removes the dominant bf16 error source.
    context = jnp.sum(weights[:, :, None] * enc.astype(jnp.float32), axis=1)  # [TB, E]

    # ---- output projection: [dec, context] @ W2^T + b2, concat-free ----------
    out = (jnp.dot(dec, w2d_ref[...], preferred_element_type=jnp.float32)
           + jnp.dot(context.astype(w2e_ref.dtype), w2e_ref[...],
                     preferred_element_type=jnp.float32)
           + b2_ref[...])
    out_ref[...] = out.astype(out_ref.dtype)                                  # [TB, H]


def _choose_batch_tile(B, S_pad, E, itemsize, sublane):
    """Batch rows handled per grid step.

    Targets (HBM-bound kernel): >= ~2 MiB of encoder bytes and >= 512 MXU
    M-rows per step (large DMAs, filled MXU sublanes, amortized ~0.35 us/step
    grid overhead), capped at ~8 MiB per encoder pipeline buffer so the
    double-buffered working set plus f32 intermediates stays well inside
    v7x's 64 MiB VMEM.  Result is sublane-aligned.
    """
    enc_row_bytes = max(S_pad * E * itemsize, 1)
    want = max(pl.cdiv(512, S_pad), pl.cdiv(2 * 1024 * 1024, enc_row_bytes))
    cap = max((8 * 1024 * 1024) // enc_row_bytes, 1)
    tb = max(min(want, cap), 1)
    return pl.cdiv(tb, sublane) * sublane


def attention_pallas(decoder_output, encoder_outputs, params, *,
                     mxu_dtype=None, tanh_dtype=None, batch_tile=None):
    """decoder_output: [B, 1, H], encoder_outputs: [B, S, E] -> [B, 1, H].

    mxu_dtype: None for strict f32 everywhere, or jnp.bfloat16 to feed the MXU
      bf16 operands with f32 accumulation.  Recommended on ALL generations
      (v5e/v6e/v7x): it halves the dominant encoder/weight DMA bytes and VMEM,
      and the MXU is bf16-native even on v5e.
    tanh_dtype: dtype for the EUP tanh.  Defaults to bf16 in fast mode
      (v6e/v7x bf16 EUP) and f32 otherwise; pass jnp.float32 on v5e (no bf16 EUP).
    batch_tile: override the automatically chosen batch rows per grid step.
    """
    B, _, H = decoder_output.shape
    _, S, E = encoder_outputs.shape
    out_dtype = decoder_output.dtype
    fast_math = mxu_dtype is not None
    if tanh_dtype is None:
        tanh_dtype = jnp.bfloat16 if fast_math else jnp.float32

    dec = decoder_output.reshape(B, H)
    enc = encoder_outputs
    w1d, w1e, b1, v, w2d, w2e, b2 = (params[k] for k in
                                     ("w1d", "w1e", "b1", "v", "w2d", "w2e", "b2"))
    if fast_math:
        # MXU operands in bf16; biases, v, softmax and context reduction stay f32.
        dec, enc = dec.astype(mxu_dtype), enc.astype(mxu_dtype)
        w1d, w1e = w1d.astype(mxu_dtype), w1e.astype(mxu_dtype)
        w2d, w2e = w2d.astype(mxu_dtype), w2e.astype(mxu_dtype)

    # Sublane tile: 8 rows for 32-bit, 16 for 16-bit operands/outputs.
    itemsize = jnp.dtype(enc.dtype).itemsize
    sublane = max(8, 32 // itemsize, 32 // jnp.dtype(out_dtype).itemsize)

    # Pad S once (host side) to a sublane multiple so the in-kernel reshapes
    # are free; padded positions are masked out of the softmax in-kernel.
    S_pad = pl.cdiv(S, sublane) * sublane
    if S_pad != S:
        enc = jnp.pad(enc, ((0, 0), (0, S_pad - S), (0, 0)))

    # Batch tiling.  No wrapper-side batch padding: the ragged last tile (if
    # any) is handled by Pallas block masking — padded rows are independent
    # (all ops are row-wise in batch) and their stores are dropped.
    if batch_tile is None:
        batch_tile = _choose_batch_tile(B, S_pad, E, itemsize, sublane)
    if batch_tile >= B:
        TB = B                                            # single full-dim block
    else:
        TB = pl.cdiv(batch_tile, sublane) * sublane       # sublane-aligned partial tile
        TB = min(TB, pl.cdiv(B, sublane) * sublane)
        if TB >= B:
            TB = B
    grid = (pl.cdiv(B, TB),)

    kernel = functools.partial(attention_kernel, seq_len=S,
                               fast_math=fast_math, tanh_dtype=tanh_dtype)
    out = pl.pallas_call(
        kernel,
        out_shape=jax.ShapeDtypeStruct((B, H), out_dtype),
        grid_spec=pltpu.PrefetchScalarGridSpec(
            num_scalar_prefetch=0,
            grid=grid,
            in_specs=[
                pl.BlockSpec((TB, H), lambda i: (i, 0)),             # dec  [TB, H]
                pl.BlockSpec((TB, S_pad, E), lambda i: (i, 0, 0)),   # enc  [TB, S_pad, E]
                pl.BlockSpec((H, H), lambda i: (0, 0)),              # W1 (dec part)
                pl.BlockSpec((E, H), lambda i: (0, 0)),              # W1 (enc part)
                pl.BlockSpec((1, H), lambda i: (0, 0)),              # b1
                pl.BlockSpec((1, H), lambda i: (0, 0)),              # v row (lane-dense)
                pl.BlockSpec((H, H), lambda i: (0, 0)),              # W2 (dec part)
                pl.BlockSpec((E, H), lambda i: (0, 0)),              # W2 (context part)
                pl.BlockSpec((1, H), lambda i: (0, 0)),              # b2
            ],
            out_specs=pl.BlockSpec((TB, H), lambda i: (i, 0)),
        ),
        compiler_params=pltpu.CompilerParams(
            # Batch-tile axis is embarrassingly parallel (megacore-shardable).
            dimension_semantics=("parallel",),
            # Raise the scoped VMEM limit above the 16/32 MiB defaults so the
            # large double-buffered enc tiles compile; 64 MiB is within v7x's
            # physical VMEM and well under v5e/v6e's 128 MiB.
            vmem_limit_bytes=64 * 1024 * 1024,
        ),
    )(dec, enc, w1d, w1e, b1, v, w2d, w2e, b2)

    # TODO(synk): on v7x, single-buffer the constant weight blocks
    # (pipeline_mode=pl.Buffered(1)) and verify the parallel batch axis shards
    # across both TensorCores (core_map / CORE_PARALLEL if it does not).
    # TODO(synk): for very long S on v7x (64 MiB VMEM), tile S as a trailing
    # "arbitrary" grid axis with an online-softmax accumulator instead of a
    # full-S encoder block.
    return out.reshape(B, 1, H)


def init_params(key, hidden_size, encoder_output_size, dtype=jnp.float32):
    """Deterministic synthetic parameters matching nn.Linear shapes.
    PyTorch stores W as [out, in]; we store transposed [in, out] and split the
    `in` axis into (hidden | encoder) parts for the concat-free formulation.
    attention_v.weight is [1, H] in PyTorch and is kept lane-dense as a row."""
    H, E = hidden_size, encoder_output_size
    ks = jax.random.split(key, 5)
    w1 = jax.random.normal(ks[0], (H + E, H), dtype) * 0.1   # attention_linear.weight^T
    b1 = jax.random.normal(ks[1], (1, H), dtype) * 0.1       # attention_linear.bias
    v = jax.random.normal(ks[2], (1, H), dtype) * 0.1        # attention_v.weight (no bias)
    w2 = jax.random.normal(ks[3], (H + E, H), dtype) * 0.1   # output_projection.weight^T
    b2 = jax.random.normal(ks[4], (1, H), dtype) * 0.1       # output_projection.bias
    return {"w1d": w1[:H], "w1e": w1[H:], "b1": b1, "v": v,
            "w2d": w2[:H], "w2e": w2[H:], "b2": b2}


def attention_reference(decoder_output, encoder_outputs, params):
    """Pure-JAX reference matching the PyTorch forward exactly."""
    _, S, _ = encoder_outputs.shape
    w1 = jnp.concatenate([params["w1d"], params["w1e"]], axis=0)
    w2 = jnp.concatenate([params["w2d"], params["w2e"]], axis=0)
    dec_rep = jnp.repeat(decoder_output, S, axis=1)
    attn_in = jnp.concatenate([dec_rep, encoder_outputs], axis=-1)
    hidden = jnp.tanh(attn_in @ w1 + params["b1"][0])
    scores = hidden @ params["v"].T                           # [B, S, 1]
    weights = jax.nn.softmax(scores, axis=1)
    context = jnp.sum(weights * encoder_outputs, axis=1, keepdims=True)
    combined = jnp.concatenate([decoder_output, context], axis=-1)
    return combined @ w2 + params["b2"][0]


if __name__ == "__main__":
    root = jax.random.PRNGKey(0)

    cases = [
        # (B, S, H, E, mxu_dtype,    batch_tile, tol)
        (2, 8, 32, 32, None,         None, 1e-3),   # strict f32, aligned S, full-batch tile
        (2, 8, 32, 32, jnp.bfloat16, None, 5e-2),   # bf16 MXU operands, S padded+masked (16)
        (20, 12, 32, 48, None,       8,    1e-3),   # ragged batch tiles + masked S pad
        (20, 12, 32, 48, jnp.bfloat16, 8,  5e-2),   # ragged + pad in fast mode
    ]
    for idx, (B, S, H, E, mxu_dtype, batch_tile, tol) in enumerate(cases):
        k_dec, k_enc, k_par = jax.random.split(jax.random.fold_in(root, idx), 3)
        decoder_output = jax.random.normal(k_dec, (B, 1, H), jnp.float32)
        encoder_outputs = jax.random.normal(k_enc, (B, S, E), jnp.float32)
        params = init_params(k_par, H, E)

        ref = attention_reference(decoder_output, encoder_outputs, params)
        out = attention_pallas(decoder_output, encoder_outputs, params,
                               mxu_dtype=mxu_dtype, batch_tile=batch_tile)
        out = jax.block_until_ready(out)
        np.testing.assert_allclose(np.asarray(out), np.asarray(ref),
                                   rtol=tol, atol=tol,
                                   err_msg=f"case {idx}: B={B} S={S} H={H} E={E} "
                                           f"mxu={mxu_dtype} tile={batch_tile}")

    print("KERNEL_OK")
</pallas_src>

<mosaic_0001>
module attributes {stable_mosaic.version = 11 : i64} {
  func.func @attention_kernel(%arg0: i32, %arg1: memref<2x32xf32, #tpu.memory_space<vmem>>, %arg2: memref<2x8x32xf32, #tpu.memory_space<vmem>>, %arg3: memref<32x32xf32, #tpu.memory_space<vmem>>, %arg4: memref<32x32xf32, #tpu.memory_space<vmem>>, %arg5: memref<1x32xf32, #tpu.memory_space<vmem>>, %arg6: memref<1x32xf32, #tpu.memory_space<vmem>>, %arg7: memref<32x32xf32, #tpu.memory_space<vmem>>, %arg8: memref<32x32xf32, #tpu.memory_space<vmem>>, %arg9: memref<1x32xf32, #tpu.memory_space<vmem>>, %arg10: memref<2x32xf32, #tpu.memory_space<vmem>>) attributes {dimension_semantics = [#tpu.dimension_semantics<parallel>], iteration_bounds = array<i64: 1>, scalar_prefetch = 0 : i64, scratch_operands = 0 : i64, tpu.core_type = #tpu.core_type<tc>, window_params = [{transform_indices = @transform_0, window_bounds = array<i64: 2, 32>}, {transform_indices = @transform_1, window_bounds = array<i64: 2, 8, 32>}, {pipeline_mode = #tpu.pipeline_mode<synchronous>, transform_indices = @transform_2, window_bounds = array<i64: 32, 32>}, {pipeline_mode = #tpu.pipeline_mode<synchronous>, transform_indices = @transform_3, window_bounds = array<i64: 32, 32>}, {pipeline_mode = #tpu.pipeline_mode<synchronous>, transform_indices = @transform_4, window_bounds = array<i64: 1, 32>}, {pipeline_mode = #tpu.pipeline_mode<synchronous>, transform_indices = @transform_5, window_bounds = array<i64: 1, 32>}, {pipeline_mode = #tpu.pipeline_mode<synchronous>, transform_indices = @transform_6, window_bounds = array<i64: 32, 32>}, {pipeline_mode = #tpu.pipeline_mode<synchronous>, transform_indices = @transform_7, window_bounds = array<i64: 32, 32>}, {pipeline_mode = #tpu.pipeline_mode<synchronous>, transform_indices = @transform_8, window_bounds = array<i64: 1, 32>}, {transform_indices = @transform_9, window_bounds = array<i64: 2, 32>}]} {
    %c0 = arith.constant 0 : index
    %c0_0 = arith.constant 0 : index
    %0 = vector.load %arg1[%c0, %c0_0] : memref<2x32xf32, #tpu.memory_space<vmem>>, vector<2x32xf32>
    %c0_1 = arith.constant 0 : index
    %c0_2 = arith.constant 0 : index
    %c0_3 = arith.constant 0 : index
    %1 = vector.load %arg2[%c0_1, %c0_2, %c0_3] : memref<2x8x32xf32, #tpu.memory_space<vmem>>, vector<2x8x32xf32>
    %2 = vector.shape_cast %1 : vector<2x8x32xf32> to vector<16x32xf32>
    %c0_4 = arith.constant 0 : index
    %c0_5 = arith.constant 0 : index
    %3 = vector.load %arg4[%c0_4, %c0_5] : memref<32x32xf32, #tpu.memory_space<vmem>>, vector<32x32xf32>
    %cst = arith.constant dense<0.000000e+00> : vector<16x32xf32>
    %4 = tpu.matmul %2, %3, %cst {dimension_numbers = #tpu.dot_dimension_numbers<[1], [0], [0], [1], [0, 0, 1, 1], [], []>} : vector<16x32xf32>, vector<32x32xf32>, vector<16x32xf32> -> vector<16x32xf32>
    %5 = vector.shape_cast %4 : vector<16x32xf32> to vector<2x8x32xf32>
    %c0_6 = arith.constant 0 : index
    %c0_7 = arith.constant 0 : index
    %6 = vector.load %arg3[%c0_6, %c0_7] : memref<32x32xf32, #tpu.memory_space<vmem>>, vector<32x32xf32>
    %cst_8 = arith.constant dense<0.000000e+00> : vector<2x32xf32>
    %7 = tpu.matmul %0, %6, %cst_8 {dimension_numbers = #tpu.dot_dimension_numbers<[1], [0], [0], [1], [0, 0, 1, 1], [], []>} : vector<2x32xf32>, vector<32x32xf32>, vector<2x32xf32> -> vector<2x32xf32>
    %c0_9 = arith.constant 0 : index
    %c0_10 = arith.constant 0 : index
    %8 = vector.load %arg5[%c0_9, %c0_10] : memref<1x32xf32, #tpu.memory_space<vmem>>, vector<1x32xf32>
    %9 = vector.broadcast %8 : vector<1x32xf32> to vector<2x32xf32>
    %10 = arith.addf %7, %9 : vector<2x32xf32>
    %11 = vector.shape_cast %10 : vector<2x32xf32> to vector<2x1x32xf32>
    %12 = vector.broadcast %11 : vector<2x1x32xf32> to vector<2x8x32xf32>
    %13 = arith.addf %5, %12 : vector<2x8x32xf32>
    %14 = math.tanh %13 : vector<2x8x32xf32>
    %c0_11 = arith.constant 0 : index
    %c0_12 = arith.constant 0 : index
    %15 = vector.load %arg6[%c0_11, %c0_12] : memref<1x32xf32, #tpu.memory_space<vmem>>, vector<1x32xf32>
    %16 = vector.shape_cast %15 : vector<1x32xf32> to vector<1x1x32xf32>
    %17 = vector.broadcast %16 : vector<1x1x32xf32> to vector<2x8x32xf32>
    %18 = arith.mulf %14, %17 : vector<2x8x32xf32>
    %cst_13 = arith.constant dense<0.000000e+00> : vector<2x8xf32>
    %19 = vector.multi_reduction <add>, %18, %cst_13 [2] : vector<2x8x32xf32> to vector<2x8xf32>
    %cst_14 = arith.constant dense<0xFF800000> : vector<2xf32>
    %20 = vector.multi_reduction <maximumf>, %19, %cst_14 [1] : vector<2x8xf32> to vector<2xf32>
    %21 = vector.shape_cast %20 : vector<2xf32> to vector<2x1xf32>
    %22 = vector.broadcast %21 : vector<2x1xf32> to vector<2x8xf32>
    %23 = arith.subf %19, %22 : vector<2x8xf32>
    %24 = math.exp %23 : vector<2x8xf32>
    %cst_15 = arith.constant dense<0.000000e+00> : vector<2xf32>
    %25 = vector.multi_reduction <add>, %24, %cst_15 [1] : vector<2x8xf32> to vector<2xf32>
    %26 = vector.shape_cast %25 : vector<2xf32> to vector<2x1xf32>
    %27 = vector.broadcast %26 : vector<2x1xf32> to vector<2x8xf32>
    %28 = arith.divf %24, %27 : vector<2x8xf32>
    %29 = vector.shape_cast %28 : vector<2x8xf32> to vector<2x8x1xf32>
    %30 = vector.broadcast %29 : vector<2x8x1xf32> to vector<2x8x32xf32>
    %31 = arith.mulf %30, %1 : vector<2x8x32xf32>
    %cst_16 = arith.constant dense<0.000000e+00> : vector<2x32xf32>
    %32 = vector.multi_reduction <add>, %31, %cst_16 [1] : vector<2x8x32xf32> to vector<2x32xf32>
    %c0_17 = arith.constant 0 : index
    %c0_18 = arith.constant 0 : index
    %33 = vector.load %arg7[%c0_17, %c0_18] : memref<32x32xf32, #tpu.memory_space<vmem>>, vector<32x32xf32>
    %cst_19 = arith.constant dense<0.000000e+00> : vector<2x32xf32>
    %34 = tpu.matmul %0, %33, %cst_19 {dimension_numbers = #tpu.dot_dimension_numbers<[1], [0], [0], [1], [0, 0, 1, 1], [], []>} : vector<2x32xf32>, vector<32x32xf32>, vector<2x32xf32> -> vector<2x32xf32>
    %c0_20 = arith.constant 0 : index
    %c0_21 = arith.constant 0 : index
    %35 = vector.load %arg8[%c0_20, %c0_21] : memref<32x32xf32, #tpu.memory_space<vmem>>, vector<32x32xf32>
    %cst_22 = arith.constant dense<0.000000e+00> : vector<2x32xf32>
    %36 = tpu.matmul %32, %35, %cst_22 {dimension_numbers = #tpu.dot_dimension_numbers<[1], [0], [0], [1], [0, 0, 1, 1], [], []>} : vector<2x32xf32>, vector<32x32xf32>, vector<2x32xf32> -> vector<2x32xf32>
    %37 = arith.addf %34, %36 : vector<2x32xf32>
    %c0_23 = arith.constant 0 : index
    %c0_24 = arith.constant 0 : index
    %38 = vector.load %arg9[%c0_23, %c0_24] : memref<1x32xf32, #tpu.memory_space<vmem>>, vector<1x32xf32>
    %39 = vector.broadcast %38 : vector<1x32xf32> to vector<2x32xf32>
    %40 = arith.addf %37, %39 : vector<2x32xf32>
    %c0_25 = arith.constant 0 : index
    %c0_26 = arith.constant 0 : index
    %41 = vector.load %arg10[%c0_25, %c0_26] : memref<2x32xf32, #tpu.memory_space<vmem>>, vector<2x32xf32>
    tpu.vector_store %arg10[%c0_25, %c0_26], %40 {strides = array<i32>} : memref<2x32xf32, #tpu.memory_space<vmem>>, vector<2x32xf32>,
    return
  }
  func.func @transform_0(%arg0: i32) -> (i32, i32) {
    %c0_i32 = arith.constant 0 : i32
    %c0_i32_0 = arith.constant 0 : i32
    return %arg0, %c0_i32 : i32, i32
  }
  func.func @transform_1(%arg0: i32) -> (i32, i32, i32) {
    %c0_i32 = arith.constant 0 : i32
    %c0_i32_0 = arith.constant 0 : i32
    %c0_i32_1 = arith.constant 0 : i32
    return %arg0, %c0_i32, %c0_i32_0 : i32, i32, i32
  }
  func.func @transform_2(%arg0: i32) -> (i32, i32) {
    %c0_i32 = arith.constant 0 : i32
    %c0_i32_0 = arith.constant 0 : i32
    %c0_i32_1 = arith.constant 0 : i32
    return %c0_i32, %c0_i32_0 : i32, i32
  }
  func.func @transform_3(%arg0: i32) -> (i32, i32) {
    %c0_i32 = arith.constant 0 : i32
    %c0_i32_0 = arith.constant 0 : i32
    %c0_i32_1 = arith.constant 0 : i32
    return %c0_i32, %c0_i32_0 : i32, i32
  }
  func.func @transform_4(%arg0: i32) -> (i32, i32) {
    %c0_i32 = arith.constant 0 : i32
    %c0_i32_0 = arith.constant 0 : i32
    %c0_i32_1 = arith.constant 0 : i32
    return %c0_i32, %c0_i32_0 : i32, i32
  }
  func.func @transform_5(%arg0: i32) -> (i32, i32) {
    %c0_i32 = arith.constant 0 : i32
    %c0_i32_0 = arith.constant 0 : i32
    %c0_i32_1 = arith.constant 0 : i32
    return %c0_i32, %c0_i32_0 : i32, i32
  }
  func.func @transform_6(%arg0: i32) -> (i32, i32) {
    %c0_i32 = arith.constant 0 : i32
    %c0_i32_0 = arith.constant 0 : i32
    %c0_i32_1 = arith.constant 0 : i32
    return %c0_i32, %c0_i32_0 : i32, i32
  }
  func.func @transform_7(%arg0: i32) -> (i32, i32) {
    %c0_i32 = arith.constant 0 : i32
    %c0_i32_0 = arith.constant 0 : i32
    %c0_i32_1 = arith.constant 0 : i32
    return %c0_i32, %c0_i32_0 : i32, i32
  }
  func.func @transform_8(%arg0: i32) -> (i32, i32) {
    %c0_i32 = arith.constant 0 : i32
    %c0_i32_0 = arith.constant 0 : i32
    %c0_i32_1 = arith.constant 0 : i32
    return %c0_i32, %c0_i32_0 : i32, i32
  }
  func.func @transform_9(%arg0: i32) -> (i32, i32) {
    %c0_i32 = arith.constant 0 : i32
    %c0_i32_0 = arith.constant 0 : i32
    return %arg0, %c0_i32 : i32, i32
  }
}

</mosaic_0001>

<llo_original>
// kernel: tpu_custom_call.1
$region0: #{tpu_custom_call.1}
  #allocation0 [shape = 'u32[]', space=smem, size = 0x4, offset = 0x4, fixed_abs, tag = 'smem constant byte address 0x4 - core index']
  #allocation1 [shape = 'u32[144,128]{1,0:T(1,128)}', space=vmem, size = 0x12000, scoped, tag = 'internal scratch']
  %s0 = inlined_call_operand.hbm [shape: f32[2,32], index: 0, kind: input, shape index: {}]
  %s1 = inlined_call_operand.hbm [shape: f32[2,8,32], index: 1, kind: input, shape index: {}]
  %s2 = inlined_call_operand.hbm [shape: f32[32,32], index: 2, kind: input, shape index: {}]
  %s3 = inlined_call_operand.hbm [shape: f32[32,32], index: 3, kind: input, shape index: {}]
  %s4 = inlined_call_operand.hbm [shape: f32[1,32], index: 4, kind: input, shape index: {}]
  %s5 = inlined_call_operand.hbm [shape: f32[1,32], index: 5, kind: input, shape index: {}]
  %s6 = inlined_call_operand.hbm [shape: f32[32,32], index: 6, kind: input, shape index: {}]
  %s7 = inlined_call_operand.hbm [shape: f32[32,32], index: 7, kind: input, shape index: {}]
  %s8 = inlined_call_operand.hbm [shape: f32[1,32], index: 8, kind: input, shape index: {}]
  %s9 = inlined_call_operand.hbm [shape: f32[2,32], index: 9, kind: output, shape index: {}]
  %s10 = sld [smem:[#allocation0]]
  $region82: #{tpu_custom_call.1} parent=0
    _
  %s12 = ssub.s32 1, %s10
  %s13 = scalar_select 0, %s12, %s10
  $region1: #{tpu_custom_call.1} parent=0
    #allocation2 [shape = 'u8[1024]{0}', space=vmem, size = 0x400, scoped, tag = 'input window, operand 0, single buffered']
    #allocation3 [shape = 's32[1]{0}', space=sflag, size = 0x4, scoped, tag = 'scoped memory for tpu_custom_call.1']
    #allocation4 [shape = 's32[1]{0}', space=sflag, size = 0x4, scoped, tag = 'scoped memory for tpu_custom_call.1']
    #allocation5 [shape = 'u8[8192]{0}', space=vmem, size = 0x2000, scoped, tag = 'input window, operand 1, single buffered']
    #allocation6 [shape = 's32[1]{0}', space=sflag, size = 0x4, scoped, tag = 'scoped memory for tpu_custom_call.1']
    #allocation7 [shape = 'u8[16384]{0}', space=vmem, size = 0x4000, scoped, tag = 'input window, operand 2, single buffered']
    #allocation8 [shape = 'u8[16384]{0}', space=vmem, size = 0x4000, scoped, tag = 'input window, operand 3, single buffered']
    #allocation9 [shape = 's32[1]{0}', space=sflag, size = 0x4, scoped, tag = 'scoped memory for tpu_custom_call.1']
    #allocation10 [shape = 'u8[512]{0}', space=vmem, size = 0x400, scoped, tag = 'input window, operand 4, single buffered']
    #allocation11 [shape = 'u8[512]{0}', space=vmem, size = 0x400, scoped, tag = 'input window, operand 5, single buffered']
    #allocation12 [shape = 's32[1]{0}', space=sflag, size = 0x4, scoped, tag = 'scoped memory for tpu_custom_call.1']
    #allocation13 [shape = 'u8[16384]{0}', space=vmem, size = 0x4000, scoped, tag = 'input window, operand 6, single buffered']
    #allocation14 [shape = 'u8[16384]{0}', space=vmem, size = 0x4000, scoped, tag = 'input window, operand 7, single buffered']
    #allocation15 [shape = 's32[1]{0}', space=sflag, size = 0x4, scoped, tag = 'scoped memory for tpu_custom_call.1']
    #allocation16 [shape = 'u8[512]{0}', space=vmem, size = 0x400, scoped, tag = 'input window, operand 8, single buffered']
    #allocation17 [shape = 'u8[1024]{0}', space=vmem, size = 0x400, scoped, tag = 'output window, operand 0, single buffered']
    %14 = vsyncpa [#allocation3], 0
    %15 = vsyncpa [#allocation6], 0
    %16 = vsyncpa [#allocation9], 0
    %17 = vsyncpa [#allocation12], 0
    %18 = vsyncpa [#allocation15], 0
    %19 = vsyncpa [#allocation4], 0
    // Predicated region
    $region2: #{tpu_custom_call.1} parent=1 // pred_check
      _
    $region3: #{tpu_custom_call.1} parent=1 // pred_check_branch
      %21 = sbr.rel (0) target = $region5
    $region4: #{tpu_custom_call.1} parent=1 // pred_region
      %s23 = ssub.s32 32, 32
      %24 = vsyncadd [#allocation3], %s23
      %s26 = sshll.u32 [#allocation2], 4
      %s27 = int_to_ptr.vmem [resolvable:$true] %s26
      %29 = dma.hbm_to_vmem [thread:$0]  %s0, 32, %s27, [#allocation3]
    $region5: #{tpu_custom_call.1} parent=1 // pred_fallthru
      _
    // Predicated region
    $region6: #{tpu_custom_call.1} parent=1 // pred_check
      _
    $region7: #{tpu_custom_call.1} parent=1 // pred_check_branch
      %31 = sbr.rel (0) target = $region9
    $region8: #{tpu_custom_call.1} parent=1 // pred_region
      %s33 = ssub.s32 256, 256
      %34 = vsyncadd [#allocation6], %s33
      %s35 = sshll.u32 [#allocation5], 4
      %s36 = int_to_ptr.vmem [resolvable:$true] %s35
      %41 = dma.hbm_to_vmem [thread:$0]  %s1, 256, %s36, [#allocation6], 128, 128, 8
    $region9: #{tpu_custom_call.1} parent=1 // pred_fallthru
      _
    // Predicated region
    $region10: #{tpu_custom_call.1} parent=1 // pred_check
      _
    $region11: #{tpu_custom_call.1} parent=1 // pred_check_branch
      %43 = sbr.rel (0) target = $region13
    $region12: #{tpu_custom_call.1} parent=1 // pred_region
      %s45 = ssub.s32 512, 512
      %46 = vsyncadd [#allocation6], %s45
      %s47 = sshll.u32 [#allocation7], 4
      %s48 = int_to_ptr.vmem [resolvable:$true] %s47
      %53 = dma.hbm_to_vmem [thread:$0]  %s2, 512, %s48, [#allocation6], 128, 128, 8
    $region13: #{tpu_custom_call.1} parent=1 // pred_fallthru
      _
    // Predicated region
    $region14: #{tpu_custom_call.1} parent=1 // pred_check
      _
    $region15: #{tpu_custom_call.1} parent=1 // pred_check_branch
      %55 = sbr.rel (0) target = $region17
    $region16: #{tpu_custom_call.1} parent=1 // pred_region
      %s57 = ssub.s32 512, 512
      %58 = vsyncadd [#allocation9], %s57
      %s59 = sshll.u32 [#allocation8], 4
      %s60 = int_to_ptr.vmem [resolvable:$true] %s59
      %65 = dma.hbm_to_vmem [thread:$0]  %s3, 512, %s60, [#allocation9], 128, 128, 8
    $region17: #{tpu_custom_call.1} parent=1 // pred_fallthru
      _
    // Predicated region
    $region18: #{tpu_custom_call.1} parent=1 // pred_check
      _
    $region19: #{tpu_custom_call.1} parent=1 // pred_check_branch
      %67 = sbr.rel (0) target = $region21
    $region20: #{tpu_custom_call.1} parent=1 // pred_region
      %s69 = ssub.s32 16, 16
      %70 = vsyncadd [#allocation9], %s69
      %s72 = sshll.u32 [#allocation10], 4
      %s73 = int_to_ptr.vmem [resolvable:$true] %s72
      %75 = dma.hbm_to_vmem [thread:$0]  %s4, 16, %s73, [#allocation9]
    $region21: #{tpu_custom_call.1} parent=1 // pred_fallthru
      _
    // Predicated region
    $region22: #{tpu_custom_call.1} parent=1 // pred_check
      _
    $region23: #{tpu_custom_call.1} parent=1 // pred_check_branch
      %77 = sbr.rel (0) target = $region25
    $region24: #{tpu_custom_call.1} parent=1 // pred_region
      %s79 = ssub.s32 16, 16
      %80 = vsyncadd [#allocation12], %s79
      %s82 = sshll.u32 [#allocation11], 4
      %s83 = int_to_ptr.vmem [resolvable:$true] %s82
      %85 = dma.hbm_to_vmem [thread:$0]  %s5, 16, %s83, [#allocation12]
    $region25: #{tpu_custom_call.1} parent=1 // pred_fallthru
      _
    // Predicated region
    $region26: #{tpu_custom_call.1} parent=1 // pred_check
      _
    $region27: #{tpu_custom_call.1} parent=1 // pred_check_branch
      %87 = sbr.rel (0) target = $region29
    $region28: #{tpu_custom_call.1} parent=1 // pred_region
      %s89 = ssub.s32 512, 512
      %90 = vsyncadd [#allocation12], %s89
      %s91 = sshll.u32 [#allocation13], 4
      %s92 = int_to_ptr.vmem [resolvable:$true] %s91
      %97 = dma.hbm_to_vmem [thread:$0]  %s6, 512, %s92, [#allocation12], 128, 128, 8
    $region29: #{tpu_custom_call.1} parent=1 // pred_fallthru
      _
    // Predicated region
    $region30: #{tpu_custom_call.1} parent=1 // pred_check
      _
    $region31: #{tpu_custom_call.1} parent=1 // pred_check_branch
      %99 = sbr.rel (0) target = $region33
    $region32: #{tpu_custom_call.1} parent=1 // pred_region
      %s101 = ssub.s32 512, 512
      %102 = vsyncadd [#allocation15], %s101
      %s103 = sshll.u32 [#allocation14], 4
      %s104 = int_to_ptr.vmem [resolvable:$true] %s103
      %109 = dma.hbm_to_vmem [thread:$0]  %s7, 512, %s104, [#allocation15], 128, 128, 8
    $region33: #{tpu_custom_call.1} parent=1 // pred_fallthru
      _
    // Predicated region
    $region34: #{tpu_custom_call.1} parent=1 // pred_check
      _
    $region35: #{tpu_custom_call.1} parent=1 // pred_check_branch
      %111 = sbr.rel (0) target = $region37
    $region36: #{tpu_custom_call.1} parent=1 // pred_region
      %s113 = ssub.s32 16, 16
      %114 = vsyncadd [#allocation15], %s113
      %s116 = sshll.u32 [#allocation16], 4
      %s117 = int_to_ptr.vmem [resolvable:$true] %s116
      %119 = dma.hbm_to_vmem [thread:$0]  %s8, 16, %s117, [#allocation15]
    $region37: #{tpu_custom_call.1} parent=1 // pred_fallthru
      _
    // Predicated region
    $region38: #{tpu_custom_call.1} parent=1 // pred_check
      _
    $region39: #{tpu_custom_call.1} parent=1 // pred_check_branch
      %121 = sbr.rel (0) target = $region41
    $region40: #{tpu_custom_call.1} parent=1 // pred_region
      %122 = dma.done [#allocation3], 32
    $region41: #{tpu_custom_call.1} parent=1 // pred_fallthru
      _
    // Predicated region
    $region42: #{tpu_custom_call.1} parent=1 // pred_check
      _
    $region43: #{tpu_custom_call.1} parent=1 // pred_check_branch
      %124 = sbr.rel (0) target = $region45
    $region44: #{tpu_custom_call.1} parent=1 // pred_region
      %125 = dma.done [#allocation6], 256
    $region45: #{tpu_custom_call.1} parent=1 // pred_fallthru
      _
    // Predicated region
    $region46: #{tpu_custom_call.1} parent=1 // pred_check
      _
    $region47: #{tpu_custom_call.1} parent=1 // pred_check_branch
      %127 = sbr.rel (0) target = $region49
    $region48: #{tpu_custom_call.1} parent=1 // pred_region
      %128 = dma.done [#allocation6], 512
    $region49: #{tpu_custom_call.1} parent=1 // pred_fallthru
      _
    // Predicated region
    $region50: #{tpu_custom_call.1} parent=1 // pred_check
      _
    $region51: #{tpu_custom_call.1} parent=1 // pred_check_branch
      %130 = sbr.rel (0) target = $region53
    $region52: #{tpu_custom_call.1} parent=1 // pred_region
      %131 = dma.done [#allocation9], 512
    $region53: #{tpu_custom_call.1} parent=1 // pred_fallthru
      _
    // Predicated region
    $region54: #{tpu_custom_call.1} parent=1 // pred_check
      _
    $region55: #{tpu_custom_call.1} parent=1 // pred_check_branch
      %133 = sbr.rel (0) target = $region57
    $region56: #{tpu_custom_call.1} parent=1 // pred_region
      %134 = dma.done [#allocation9], 16
    $region57: #{tpu_custom_call.1} parent=1 // pred_fallthru
      _
    // Predicated region
    $region58: #{tpu_custom_call.1} parent=1 // pred_check
      _
    $region59: #{tpu_custom_call.1} parent=1 // pred_check_branch
      %136 = sbr.rel (0) target = $region61
    $region60: #{tpu_custom_call.1} parent=1 // pred_region
      %137 = dma.done [#allocation12], 16
    $region61: #{tpu_custom_call.1} parent=1 // pred_fallthru
      _
    // Predicated region
    $region62: #{tpu_custom_call.1} parent=1 // pred_check
      _
    $region63: #{tpu_custom_call.1} parent=1 // pred_check_branch
      %139 = sbr.rel (0) target = $region65
    $region64: #{tpu_custom_call.1} parent=1 // pred_region
      %140 = dma.done [#allocation12], 512
    $region65: #{tpu_custom_call.1} parent=1 // pred_fallthru
      _
    // Predicated region
    $region66: #{tpu_custom_call.1} parent=1 // pred_check
      _
    $region67: #{tpu_custom_call.1} parent=1 // pred_check_branch
      %142 = sbr.rel (0) target = $region69
    $region68: #{tpu_custom_call.1} parent=1 // pred_region
      %143 = dma.done [#allocation15], 512
    $region69: #{tpu_custom_call.1} parent=1 // pred_fallthru
      _
    // Predicated region
    $region70: #{tpu_custom_call.1} parent=1 // pred_check
      _
    $region71: #{tpu_custom_call.1} parent=1 // pred_check_branch
      %145 = sbr.rel (0) target = $region73
    $region72: #{tpu_custom_call.1} parent=1 // pred_region
      %146 = dma.done [#allocation15], 16
    $region73: #{tpu_custom_call.1} parent=1 // pred_fallthru
      _
    %v147 = vld [vmem:[#allocation2] sm:$0x3]
    %v148 = vld [vmem:[#allocation5] sm:$0xff]
    %v149 = vld [vmem:[#allocation5 + $0x8] sm:$0xff]
    %v150 = vld [vmem:[#allocation8] sm:$0xff]
    %v151 = vld [vmem:[#allocation8 + $0x8] sm:$0xff]
    %v152 = vld [vmem:[#allocation8 + $0x10] sm:$0xff]
    %v153 = vld [vmem:[#allocation8 + $0x18] sm:$0xff]
    %vm154 = vcmask 261120
    %v156 = vsel %vm154, %v148, 0
    %v159 = vsel %vm154, %v149, 0
    %161 = vmatprep.subr.mxu0 0.0
    %162 = vmatpush1.msra.mxu0 %v150
    %163 = vmatprep.subr.mxu0 0.0
    %164 = vmatpush1.msra.mxu0 %v151
    %165 = vmatprep.subr.mxu0 0.0
    %166 = vmatpush1.msra.mxu0 %v152
    %167 = vmatprep.subr.mxu0 0.0
    %168 = vmatpush1.msra.mxu0 %v153
    %169 = vmatprep.subr.mxu0 0.0
    %170 = vmatpush1.msra.mxu0 0.0
    %171 = vmatprep.subr.mxu0 0.0
    %172 = vmatpush1.msra.mxu0 0.0
    %173 = vmatprep.subr.mxu0 0.0
    %174 = vmatpush1.msra.mxu0 0.0
    %175 = vmatprep.subr.mxu0 0.0
    %176 = vmatpush1.msra.mxu0 0.0
    %177 = vmatprep.subr.mxu0 0.0
    %178 = vmatpush1.msra.mxu0 0.0
    %179 = vmatprep.subr.mxu0 0.0
    %180 = vmatpush1.msra.mxu0 0.0
    %181 = vmatprep.subr.mxu0 0.0
    %182 = vmatpush1.msra.mxu0 0.0
    %183 = vmatprep.subr.mxu0 0.0
    %184 = vmatpush1.msra.mxu0 0.0
    %185 = vmatprep.subr.mxu0 0.0
    %186 = vmatpush1.msra.mxu0 0.0
    %187 = vmatprep.subr.mxu0 0.0
    %188 = vmatpush1.msra.mxu0 0.0
    %189 = vmatprep.subr.mxu0 0.0
    %190 = vmatpush1.msra.mxu0 0.0
    %191 = vmatprep.subr.mxu0 0.0
    %192 = vmatpush1.msra.mxu0 0.0
    %193 = vmatprep.subr.mxu0 0.0
    %194 = vmatpush1.msra.mxu0 0.0
    %195 = vmatprep.subr.mxu0 0.0
    %196 = vmatpush1.msra.mxu0 0.0
    %197 = vmatprep.subr.mxu0 0.0
    %198 = vmatpush1.msra.mxu0 0.0
    %199 = vmatprep.subr.mxu0 0.0
    %200 = vmatpush1.msra.mxu0 0.0
    %201 = vmatprep.subr.mxu0 0.0
    %202 = vmatpush1.msra.mxu0 0.0
    %203 = vmatprep.subr.mxu0 0.0
    %204 = vmatpush1.msra.mxu0 0.0
    %205 = vmatprep.subr.mxu0 0.0
    %206 = vmatpush1.msra.mxu0 0.0
    %207 = vmatprep.subr.mxu0 0.0
    %208 = vmatpush1.msra.mxu0 0.0
    %209 = vmatprep.subr.mxu0 0.0
    %210 = vmatpush1.msra.mxu0 0.0
    %211 = vmatprep.subr.mxu0 0.0
    %212 = vmatpush1.msra.mxu0 0.0
    %213 = vmatprep.subr.mxu0 0.0
    %214 = vmatpush1.msra.mxu0 0.0
    %215 = vmatprep.subr.mxu0 0.0
    %216 = vmatpush1.msra.mxu0 0.0
    %217 = vmatprep.subr.mxu0 0.0
    %218 = vmatpush1.msra.mxu0 0.0
    %219 = vmatprep.subr.mxu0 0.0
    %220 = vmatpush1.msra.mxu0 0.0
    %221 = vmatprep.subr.mxu0 0.0
    %222 = vmatpush1.msra.mxu0 0.0
    %223 = vmatprep.subr.mxu0 0.0
    %224 = vmatpush1.msra.mxu0 0.0
    %225 = vmatprep.mubr.f32.mxu0 0.0
    %226 = vmatmul.mubr.f32.gmra.mrb[0].mxu0 %v156
    %v227 = vpop.f32.mrb[0].mxu0
    %v228 = vadd.f32 0.0, %v227
    %v229 = vpop.f32.mrb[0].mxu0
    %230 = vmatprep.mubr.f32.mxu0 0.0
    %231 = vmatmul.mubr.f32.gmra.mrb[0].mxu0 %v159
    %v232 = vpop.f32.mrb[0].mxu0
    %v233 = vadd.f32 0.0, %v232
    %v234 = vpop.f32.mrb[0].mxu0
    %235 = vdwg.mxu0
    %v236 = vld [vmem:[#allocation7] sm:$0xff]
    %v237 = vld [vmem:[#allocation7 + $0x8] sm:$0xff]
    %v238 = vld [vmem:[#allocation7 + $0x10] sm:$0xff]
    %v239 = vld [vmem:[#allocation7 + $0x18] sm:$0xff]
    %v240 = vld [vmem:[#allocation10] sm:$0x1]
    %v242 = vlaneseq
    %v243 = vshrl.u32 %v242, 7
    %v244 = vsub.s32 0, %v243
    %v245 = vrot.slane %v240, %v244
    %v248 = vsel %vm154, %v147, 0
    %250 = vmatprep.subr.mxu0 0.0
    %251 = vmatpush1.msra.mxu0 %v236
    %252 = vmatprep.subr.mxu0 0.0
    %253 = vmatpush1.msra.mxu0 %v237
    %254 = vmatprep.subr.mxu0 0.0
    %255 = vmatpush1.msra.mxu0 %v238
    %256 = vmatprep.subr.mxu0 0.0
    %257 = vmatpush1.msra.mxu0 %v239
    %258 = vmatprep.subr.mxu0 0.0
    %259 = vmatpush1.msra.mxu0 0.0
    %260 = vmatprep.subr.mxu0 0.0
    %261 = vmatpush1.msra.mxu0 0.0
    %262 = vmatprep.subr.mxu0 0.0
    %263 = vmatpush1.msra.mxu0 0.0
    %264 = vmatprep.subr.mxu0 0.0
    %265 = vmatpush1.msra.mxu0 0.0
    %266 = vmatprep.subr.mxu0 0.0
    %267 = vmatpush1.msra.mxu0 0.0
    %268 = vmatprep.subr.mxu0 0.0
    %269 = vmatpush1.msra.mxu0 0.0
    %270 = vmatprep.subr.mxu0 0.0
    %271 = vmatpush1.msra.mxu0 0.0
    %272 = vmatprep.subr.mxu0 0.0
    %273 = vmatpush1.msra.mxu0 0.0
    %274 = vmatprep.subr.mxu0 0.0
    %275 = vmatpush1.msra.mxu0 0.0
    %276 = vmatprep.subr.mxu0 0.0
    %277 = vmatpush1.msra.mxu0 0.0
    %278 = vmatprep.subr.mxu0 0.0
    %279 = vmatpush1.msra.mxu0 0.0
    %280 = vmatprep.subr.mxu0 0.0
    %281 = vmatpush1.msra.mxu0 0.0
    %282 = vmatprep.subr.mxu0 0.0
    %283 = vmatpush1.msra.mxu0 0.0
    %284 = vmatprep.subr.mxu0 0.0
    %285 = vmatpush1.msra.mxu0 0.0
    %286 = vmatprep.subr.mxu0 0.0
    %287 = vmatpush1.msra.mxu0 0.0
    %288 = vmatprep.subr.mxu0 0.0
    %289 = vmatpush1.msra.mxu0 0.0
    %290 = vmatprep.subr.mxu0 0.0
    %291 = vmatpush1.msra.mxu0 0.0
    %292 = vmatprep.subr.mxu0 0.0
    %293 = vmatpush1.msra.mxu0 0.0
    %294 = vmatprep.subr.mxu0 0.0
    %295 = vmatpush1.msra.mxu0 0.0
    %296 = vmatprep.subr.mxu0 0.0
    %297 = vmatpush1.msra.mxu0 0.0
    %298 = vmatprep.subr.mxu0 0.0
    %299 = vmatpush1.msra.mxu0 0.0
    %300 = vmatprep.subr.mxu0 0.0
    %301 = vmatpush1.msra.mxu0 0.0
    %302 = vmatprep.subr.mxu0 0.0
    %303 = vmatpush1.msra.mxu0 0.0
    %304 = vmatprep.subr.mxu0 0.0
    %305 = vmatpush1.msra.mxu0 0.0
    %306 = vmatprep.subr.mxu0 0.0
    %307 = vmatpush1.msra.mxu0 0.0
    %308 = vmatprep.subr.mxu0 0.0
    %309 = vmatpush1.msra.mxu0 0.0
    %310 = vmatprep.subr.mxu0 0.0
    %311 = vmatpush1.msra.mxu0 0.0
    %312 = vmatprep.subr.mxu0 0.0
    %313 = vmatpush1.msra.mxu0 0.0
    %314 = vmatprep.mubr.f32.mxu0 0.0
    %315 = vmatmul.mubr.f32.gmra.mrb[0].mxu0 %v248
    %v316 = vpop.f32.mrb[0].mxu0
    %v317 = vadd.f32 %v245, %v316
    %v318 = vpop.f32.mrb[0].mxu0
    %319 = vdwg.mxu0
    %v322 = vunpack.c.l.s4 1966171168
    %v323 = vunpack.c.0.s8 %v322
    %v324 = vlaneseq
    %v325 = vshrl.u32 %v324, 7
    %v326 = vsub.s32 %v323, %v325
    %v327 = vrot.slane %v317, %v326
    %v328 = vcombine.high %v327, %v327
    %v330 = vunpack.c.l.s4 1966171168
    %v331 = vunpack.c.0.s8 %v330
    %v332 = vlaneseq
    %v333 = vshrl.u32 %v332, 7
    %v334 = vsub.s32 %v331, %v333
    %v335 = vrot.slane %v327, %v334
    %v337 = vunpack.c.l.s4 1966171168
    %v338 = vunpack.c.0.s8 %v337
    %v339 = vlaneseq
    %v340 = vshrl.u32 %v339, 7
    %v341 = vsub.s32 %v338, %v340
    %v342 = vrot.slane %v328, %v341
    %v343 = vlaneseq
    %v344 = vshrl.u32 %v343, 7
    %v345 = vsub.s32 0, %v344
    %v346 = vrot.slane %v335, %v345
    %v347 = vlaneseq
    %v348 = vshrl.u32 %v347, 7
    %v349 = vsub.s32 0, %v348
    %v350 = vrot.slane %v342, %v349
    %v353 = vadd.f32 %v228, %v346
    %v354 = vadd.f32 %v233, %v350
    %v355 = vtanh.pop %v353
    %v356 = vtanh.pop %v354
    %v357 = vld [vmem:[#allocation11] sm:$0x1]
    %v359 = vlaneseq
    %v360 = vshrl.u32 %v359, 7
    %v361 = vsub.s32 0, %v360
    %v362 = vrot.slane %v357, %v361
    %v364 = vmul.f32 %v355, %v362
    %v365 = vmul.f32 %v356, %v362
    %v366 = vsel %vm154, %v364, 0.0
    %367 = vadd.xlane.f32.xlu0 %v366
    %v368 = vpop.xlane.xlu0 %367
    %v369 = vsel %vm154, %v365, 0.0
    %370 = vadd.xlane.f32.xlu0 %v369
    %v371 = vpop.xlane.xlu0 %370
    %v374 = vlaneseq
    %v375 = vand.u32 %v374, 127
    %v376 = vlaneseq
    %v377 = vshrl.u32 %v376, 7
    %v378 = vsub.s32 %v375, %v377
    %v379 = vrot.slane %v368, %v378
    %v380 = vlaneseq
    %v381 = vshrl.u32 %v380, 7
    %v382 = vsub.s32 %v375, %v381
    %v383 = vrot.slane %v371, %v382
    %vm384 = vcmask 1041409
    %v385 = vsel %vm384, %v383, %v379
    %vm387 = vcmask 58368
    %v388 = vsel %vm387, %v385, -inf
    %389 = vmax.xlane.f32.xlu0 %v388
    %v390 = vpop.xlane.xlu0 %389
    %v392 = vlaneseq
    %v393 = vshrl.u32 %v392, 7
    %v394 = vsub.s32 0, %v393
    %v395 = vrot.slane %v390, %v394
    %v396 = vlaneseq
    %v397 = vshrl.u32 %v396, 7
    %v398 = vsub.s32 1, %v397
    %v399 = vrot.slane %v390, %v398
    %v402 = vsub.f32 %v368, %v395
    %v403 = vsub.f32 %v371, %v399
    %v404 = vmul.f32 %v402, 1.442695
    %v405 = vpow.pop %v404
    %v406 = vmul.f32 %v403, 1.442695
    %v407 = vpow.pop %v406
    %410 = vset.pattern.permute.xlu0 0
    %411 = vperm.xlu0 %410, %v405
    %v412 = vpop.permute.xlu0 %411
    %413 = vset.pattern.permute.xlu0 0
    %414 = vperm.xlu0 %413, %v407
    %v415 = vpop.permute.xlu0 %414
    %v416 = vlaneseq
    %v417 = vshrl.u32 %v416, 7
    %v418 = vsub.s32 %v375, %v417
    %v419 = vrot.slane %v412, %v418
    %v420 = vlaneseq
    %v421 = vshrl.u32 %v420, 7
    %v422 = vsub.s32 %v375, %v421
    %v423 = vrot.slane %v415, %v422
    %v424 = vsel %vm384, %v423, %v419
    %v426 = vsel %vm387, %v424, 0.0
    %427 = vadd.xlane.f32.xlu0 %v426
    %v428 = vpop.xlane.xlu0 %427
    %v430 = vlaneseq
    %v431 = vshrl.u32 %v430, 7
    %v432 = vsub.s32 0, %v431
    %v433 = vrot.slane %v428, %v432
    %v434 = vlaneseq
    %v435 = vshrl.u32 %v434, 7
    %v436 = vsub.s32 1, %v435
    %v437 = vrot.slane %v428, %v436
    %v440 = vrcp.pop %v433
    %v441 = vmul.f32 %v405, %v440
    %v442 = vrcp.pop %v437
    %v443 = vmul.f32 %v407, %v442
    %445 = vset.pattern.permute.xlu0 0
    %446 = vperm.xlu0 %445, %v441
    %v447 = vpop.permute.xlu0 %446
    %450 = vset.pattern.permute.xlu0 0
    %451 = vperm.xlu0 %450, %v443
    %v452 = vpop.permute.xlu0 %451
    %v454 = vmul.f32 %v447, %v148
    %v455 = vmul.f32 %v452, %v149
    %v456 = vsel %vm154, %v454, 0.0
    %v457 = vrot.slane %v456, 4
    %v458 = vadd.f32 %v456, %v457
    %v459 = vrot.slane %v458, 2
    %v460 = vadd.f32 %v458, %v459
    %v461 = vrot.slane %v460, 1
    %v462 = vadd.f32 %v460, %v461
    %v463 = vsel %vm154, %v455, 0.0
    %v464 = vrot.slane %v463, 4
    %v465 = vadd.f32 %v463, %v464
    %v466 = vrot.slane %v465, 2
    %v467 = vadd.f32 %v465, %v466
    %v468 = vrot.slane %v467, 1
    %v469 = vadd.f32 %v467, %v468
    %v470 = vld [vmem:[#allocation13] sm:$0xff]
    %v471 = vld [vmem:[#allocation13 + $0x8] sm:$0xff]
    %v472 = vld [vmem:[#allocation13 + $0x10] sm:$0xff]
    %v473 = vld [vmem:[#allocation13 + $0x18] sm:$0xff]
    %v474 = vld [vmem:[#allocation14] sm:$0xff]
    %v475 = vld [vmem:[#allocation14 + $0x8] sm:$0xff]
    %v476 = vld [vmem:[#allocation14 + $0x10] sm:$0xff]
    %v477 = vld [vmem:[#allocation14 + $0x18] sm:$0xff]
    %v480 = vsel %vm384, %v469, %v462
    %v481 = vsel %vm154, %v480, 0
    %483 = vmatprep.subr.mxu0 0.0
    %484 = vmatpush1.msra.mxu0 %v474
    %485 = vmatprep.subr.mxu0 0.0
    %486 = vmatpush1.msra.mxu0 %v475
    %487 = vmatprep.subr.mxu0 0.0
    %488 = vmatpush1.msra.mxu0 %v476
    %489 = vmatprep.subr.mxu0 0.0
    %490 = vmatpush1.msra.mxu0 %v477
    %491 = vmatprep.subr.mxu0 0.0
    %492 = vmatpush1.msra.mxu0 0.0
    %493 = vmatprep.subr.mxu0 0.0
    %494 = vmatpush1.msra.mxu0 0.0
    %495 = vmatprep.subr.mxu0 0.0
    %496 = vmatpush1.msra.mxu0 0.0
    %497 = vmatprep.subr.mxu0 0.0
    %498 = vmatpush1.msra.mxu0 0.0
    %499 = vmatprep.subr.mxu0 0.0
    %500 = vmatpush1.msra.mxu0 0.0
    %501 = vmatprep.subr.mxu0 0.0
    %502 = vmatpush1.msra.mxu0 0.0
    %503 = vmatprep.subr.mxu0 0.0
    %504 = vmatpush1.msra.mxu0 0.0
    %505 = vmatprep.subr.mxu0 0.0
    %506 = vmatpush1.msra.mxu0 0.0
    %507 = vmatprep.subr.mxu0 0.0
    %508 = vmatpush1.msra.mxu0 0.0
    %509 = vmatprep.subr.mxu0 0.0
    %510 = vmatpush1.msra.mxu0 0.0
    %511 = vmatprep.subr.mxu0 0.0
    %512 = vmatpush1.msra.mxu0 0.0
    %513 = vmatprep.subr.mxu0 0.0
    %514 = vmatpush1.msra.mxu0 0.0
    %515 = vmatprep.subr.mxu0 0.0
    %516 = vmatpush1.msra.mxu0 0.0
    %517 = vmatprep.subr.mxu0 0.0
    %518 = vmatpush1.msra.mxu0 0.0
    %519 = vmatprep.subr.mxu0 0.0
    %520 = vmatpush1.msra.mxu0 0.0
    %521 = vmatprep.subr.mxu0 0.0
    %522 = vmatpush1.msra.mxu0 0.0
    %523 = vmatprep.subr.mxu0 0.0
    %524 = vmatpush1.msra.mxu0 0.0
    %525 = vmatprep.subr.mxu0 0.0
    %526 = vmatpush1.msra.mxu0 0.0
    %527 = vmatprep.subr.mxu0 0.0
    %528 = vmatpush1.msra.mxu0 0.0
    %529 = vmatprep.subr.mxu0 0.0
    %530 = vmatpush1.msra.mxu0 0.0
    %531 = vmatprep.subr.mxu0 0.0
    %532 = vmatpush1.msra.mxu0 0.0
    %533 = vmatprep.subr.mxu0 0.0
    %534 = vmatpush1.msra.mxu0 0.0
    %535 = vmatprep.subr.mxu0 0.0
    %536 = vmatpush1.msra.mxu0 0.0
    %537 = vmatprep.subr.mxu0 0.0
    %538 = vmatpush1.msra.mxu0 0.0
    %539 = vmatprep.subr.mxu0 0.0
    %540 = vmatpush1.msra.mxu0 0.0
    %541 = vmatprep.subr.mxu0 0.0
    %542 = vmatpush1.msra.mxu0 0.0
    %543 = vmatprep.subr.mxu0 0.0
    %544 = vmatpush1.msra.mxu0 0.0
    %545 = vmatprep.subr.mxu0 0.0
    %546 = vmatpush1.msra.mxu0 0.0
    %547 = vmatprep.mubr.f32.mxu0 0.0
    %548 = vmatmul.mubr.f32.gmra.mrb[0].mxu0 %v481
    %v549 = vpop.f32.mrb[0].mxu0
    %v550 = vadd.f32 0.0, %v549
    %v551 = vpop.f32.mrb[0].mxu0
    %552 = vdwg.mxu0
    %553 = vmatprep.subr.mxu0 0.0
    %554 = vmatpush1.msra.mxu0 %v470
    %555 = vmatprep.subr.mxu0 0.0
    %556 = vmatpush1.msra.mxu0 %v471
    %557 = vmatprep.subr.mxu0 0.0
    %558 = vmatpush1.msra.mxu0 %v472
    %559 = vmatprep.subr.mxu0 0.0
    %560 = vmatpush1.msra.mxu0 %v473
    %561 = vmatprep.subr.mxu0 0.0
    %562 = vmatpush1.msra.mxu0 0.0
    %563 = vmatprep.subr.mxu0 0.0
    %564 = vmatpush1.msra.mxu0 0.0
    %565 = vmatprep.subr.mxu0 0.0
    %566 = vmatpush1.msra.mxu0 0.0
    %567 = vmatprep.subr.mxu0 0.0
    %568 = vmatpush1.msra.mxu0 0.0
    %569 = vmatprep.subr.mxu0 0.0
    %570 = vmatpush1.msra.mxu0 0.0
    %571 = vmatprep.subr.mxu0 0.0
    %572 = vmatpush1.msra.mxu0 0.0
    %573 = vmatprep.subr.mxu0 0.0
    %574 = vmatpush1.msra.mxu0 0.0
    %575 = vmatprep.subr.mxu0 0.0
    %576 = vmatpush1.msra.mxu0 0.0
    %577 = vmatprep.subr.mxu0 0.0
    %578 = vmatpush1.msra.mxu0 0.0
    %579 = vmatprep.subr.mxu0 0.0
    %580 = vmatpush1.msra.mxu0 0.0
    %581 = vmatprep.subr.mxu0 0.0
    %582 = vmatpush1.msra.mxu0 0.0
    %583 = vmatprep.subr.mxu0 0.0
    %584 = vmatpush1.msra.mxu0 0.0
    %585 = vmatprep.subr.mxu0 0.0
    %586 = vmatpush1.msra.mxu0 0.0
    %587 = vmatprep.subr.mxu0 0.0
    %588 = vmatpush1.msra.mxu0 0.0
    %589 = vmatprep.subr.mxu0 0.0
    %590 = vmatpush1.msra.mxu0 0.0
    %591 = vmatprep.subr.mxu0 0.0
    %592 = vmatpush1.msra.mxu0 0.0
    %593 = vmatprep.subr.mxu0 0.0
    %594 = vmatpush1.msra.mxu0 0.0
    %595 = vmatprep.subr.mxu0 0.0
    %596 = vmatpush1.msra.mxu0 0.0
    %597 = vmatprep.subr.mxu0 0.0
    %598 = vmatpush1.msra.mxu0 0.0
    %599 = vmatprep.subr.mxu0 0.0
    %600 = vmatpush1.msra.mxu0 0.0
    %601 = vmatprep.subr.mxu0 0.0
    %602 = vmatpush1.msra.mxu0 0.0
    %603 = vmatprep.subr.mxu0 0.0
    %604 = vmatpush1.msra.mxu0 0.0
    %605 = vmatprep.subr.mxu0 0.0
    %606 = vmatpush1.msra.mxu0 0.0
    %607 = vmatprep.subr.mxu0 0.0
    %608 = vmatpush1.msra.mxu0 0.0
    %609 = vmatprep.subr.mxu0 0.0
    %610 = vmatpush1.msra.mxu0 0.0
    %611 = vmatprep.subr.mxu0 0.0
    %612 = vmatpush1.msra.mxu0 0.0
    %613 = vmatprep.subr.mxu0 0.0
    %614 = vmatpush1.msra.mxu0 0.0
    %615 = vmatprep.subr.mxu0 0.0
    %616 = vmatpush1.msra.mxu0 0.0
    %617 = vmatprep.mubr.f32.mxu0 0.0
    %618 = vmatmul.mubr.f32.gmra.mrb[0].mxu0 %v248
    %v619 = vpop.f32.mrb[0].mxu0
    %v620 = vadd.f32 %v550, %v619
    %v621 = vpop.f32.mrb[0].mxu0
    %622 = vdwg.mxu0
    %v623 = vld [vmem:[#allocation16] sm:$0x1]
    %v625 = vlaneseq
    %v626 = vshrl.u32 %v625, 7
    %v627 = vsub.s32 0, %v626
    %v628 = vrot.slane %v623, %v627
    %v630 = vadd.f32 %v620, %v628
    %vm631 = vcmask 254976
    %632 = vst.msk [vmem:[#allocation17] sm:$0x3] %vm631, %v630
    // Predicated region
    $region74: #{tpu_custom_call.1} parent=1 // pred_check
      _
    $region75: #{tpu_custom_call.1} parent=1 // pred_check_branch
      %634 = sbr.rel (0) target = $region77
    $region76: #{tpu_custom_call.1} parent=1 // pred_region
      %s636 = ssub.s32 32, 32
      %637 = vsyncadd [#allocation4], %s636
      %s639 = sshll.u32 [#allocation17], 4
      %s640 = int_to_ptr.vmem [resolvable:$true] %s639
      %642 = dma.vmem_to_hbm [thread:$0]  %s640, 32, %s9, [#allocation4]
    $region77: #{tpu_custom_call.1} parent=1 // pred_fallthru
      _
    // Predicated region
    $region78: #{tpu_custom_call.1} parent=1 // pred_check
      _
    $region79: #{tpu_custom_call.1} parent=1 // pred_check_branch
      %644 = sbr.rel (0) target = $region81
    $region80: #{tpu_custom_call.1} parent=1 // pred_region
      %645 = dma.done [#allocation4], 32
    $region81: #{tpu_custom_call.1} parent=1 // pred_fallthru
      _
    %646 = vsyncpa [#allocation3], 1
    %647 = vsyncpa [#allocation6], 1
    %648 = vsyncpa [#allocation9], 1
    %649 = vsyncpa [#allocation12], 1
    %650 = vsyncpa [#allocation15], 1
    %651 = vsyncpa [#allocation4], 1

</llo_original>
